<compile_context>
chip_gen: v7x
topology: tpu7x:2x2x1
jax: 0.10.0
libtpu: 0.0.40
codegen_flags: <defaults>
</compile_context>

<pallas_src>
import jax
import jax.numpy as jnp
from jax.experimental import pallas as pl
from jax.experimental.pallas import tpu as pltpu

LANES = 128
SUBLANE_TILE = 8 * LANES          # 1024 elements = one (8, 128) f32 layout tile
MAX_TILE_ROWS = 4096              # (4096, 128) f32 = 2 MiB per pipeline buffer
_SMALL_N = 262_144                # below this, XLA's fused scalar FMA wins


def _round_up(x, m):
    return -(-x // m) * m


def _choose_tile_rows(rows):
    """Pick a block row count: <= 2 MiB/buffer, multiple of 8, and (when the
    problem is big enough) at least 2 grid steps so both v7x TCs get work."""
    if rows < 16:
        return rows                                   # single (full-array) block
    return max(8, min(MAX_TILE_ROWS, _round_up(pl.cdiv(rows, 2), 8)))


def _linear_kernel(w_ref, b_ref, x_ref, o_ref):
    # Scalar-prefetch refs (SMEM) come first, then the pipelined VMEM tiles.
    # y = x * w + b  ==  x @ W.T + b  for a (1, 1) weight.
    o_ref[...] = x_ref[...] * w_ref[0] + b_ref[0]


@jax.jit
def _regression_pallas(x, weight, bias):
    n = x.shape[0]
    dtype = x.dtype
    itemsize = jnp.dtype(dtype).itemsize

    # Lane-dense layout: view the (N, 1) column as a (rows, 128) slab so every
    # vreg carries 1024 useful elements and stores are unmasked.
    if n % LANES == 0:
        # Zero-copy path: pure reshape, no pad, no trailing slice.
        rows = n // LANES
        x2d = x.reshape(rows, LANES)
        padded = False
    else:
        # Pad only to a multiple of 8x128 = 1024 elements (not a full tile).
        padded_n = _round_up(n, SUBLANE_TILE)
        rows = padded_n // LANES
        x2d = jnp.pad(x.reshape(-1), (0, padded_n - n)).reshape(rows, LANES)
        padded = True

    tile_rows = _choose_tile_rows(rows)
    num_tiles = pl.cdiv(rows, tile_rows)
    total = rows * LANES

    # Weight/bias as scalar-prefetch operands -> resident SMEM scalars.
    w_s = weight.reshape(1).astype(dtype)
    b_s = bias.reshape(1).astype(dtype)

    grid_spec = pltpu.PrefetchScalarGridSpec(
        num_scalar_prefetch=2,
        grid=(num_tiles,),
        in_specs=[pl.BlockSpec((tile_rows, LANES), lambda i, w, b: (i, 0))],
        out_specs=pl.BlockSpec((tile_rows, LANES), lambda i, w, b: (i, 0)),
    )

    y2d = pl.pallas_call(
        _linear_kernel,
        out_shape=jax.ShapeDtypeStruct((rows, LANES), dtype),
        grid_spec=grid_spec,
        compiler_params=pltpu.CompilerParams(
            # Pure streaming kernel: both v7x TensorCores take a slice of the
            # batch; harmless on single-TC v5e/v6e.
            dimension_semantics=("parallel",),
        ),
        cost_estimate=pl.CostEstimate(
            flops=2 * total,                  # one mul + one add per element
            transcendentals=0,
            bytes_accessed=2 * total * itemsize,
        ),
    )(w_s, b_s, x2d)

    if padded:
        return y2d.reshape(-1)[:n].reshape(n, 1)
    return y2d.reshape(n, 1)


def regression_forward(x, weight, bias, *, force_pallas=False):
    """Equivalent of nn.Linear(1, 1): x (N,1), weight (1,1), bias (1,) -> (N,1)."""
    n, in_f = x.shape
    assert in_f == 1 and weight.shape == (1, 1) and bias.shape == (1,)
    if not force_pallas and n < _SMALL_N:
        # For small batches the pallas_call is pure launch overhead; XLA's
        # fused scalar FMA already runs at HBM roofline.
        return x * weight[0, 0] + bias[0]
    return _regression_pallas(x, weight, bias)


if __name__ == "__main__":
    key = jax.random.PRNGKey(0)
    kx1, kx2, kw, kb, ks = jax.random.split(key, 5)

    # PyTorch default init for nn.Linear(1, 1): U(-1/sqrt(1), 1/sqrt(1)) = U(-1, 1).
    weight = jax.random.uniform(kw, (1, 1), jnp.float32, minval=-1.0, maxval=1.0)
    bias = jax.random.uniform(kb, (1,), jnp.float32, minval=-1.0, maxval=1.0)

    # --- (a) aligned N (N % 128 == 0): zero-copy reshape path, 2-tile grid. ---
    n_a = 2048 * LANES                     # 262144 elements -> rows=2048, 2 tiles
    x_a = jax.random.normal(kx1, (n_a, 1), jnp.float32)
    y_a = jax.block_until_ready(regression_forward(x_a, weight, bias))
    y_a_ref = x_a @ weight.T + bias
    assert y_a.shape == (n_a, 1)
    assert jnp.allclose(y_a, y_a_ref, atol=1e-6), "mismatch (aligned pallas path)"

    # --- (b) ragged N: pads to a multiple of 1024 elements, slices the tail off. ---
    n_b = 1000 * LANES + 57                # 128057 elements (unaligned)
    x_b = jax.random.normal(kx2, (n_b, 1), jnp.float32)
    y_b = jax.block_until_ready(regression_forward(x_b, weight, bias, force_pallas=True))
    y_b_ref = x_b @ weight.T + bias
    assert y_b.shape == (n_b, 1)
    assert jnp.allclose(y_b, y_b_ref, atol=1e-6), "mismatch (padded pallas path)"

    # --- (c) small batch (matches the original (8, 1) nn.Linear-style usage). ---
    x_small = jax.random.normal(ks, (8, 1), jnp.float32)
    y_small = jax.block_until_ready(regression_forward(x_small, weight, bias))
    y_small_ref = x_small @ weight.T + bias
    assert y_small.shape == (8, 1)
    assert jnp.allclose(y_small, y_small_ref, atol=1e-6), "mismatch (small path)"

    print("KERNEL_OK")
</pallas_src>

<mosaic_0001>
module attributes {stable_mosaic.version = 11 : i64} {
  func.func @_linear_kernel(%arg0: i32, %arg1: memref<1xf32, #tpu.memory_space<smem>>, %arg2: memref<1xf32, #tpu.memory_space<smem>>, %arg3: memref<1024x128xf32, #tpu.memory_space<vmem>>, %arg4: memref<1024x128xf32, #tpu.memory_space<vmem>>) attributes {dimension_semantics = [#tpu.dimension_semantics<parallel>], iteration_bounds = array<i64: 2>, scalar_prefetch = 2 : i64, scratch_operands = 0 : i64, tpu.core_type = #tpu.core_type<tc>, window_params = [{transform_indices = @transform_0, window_bounds = array<i64: 1024, 128>}, {transform_indices = @transform_1, window_bounds = array<i64: 1024, 128>}]} {
    %c0 = arith.constant 0 : index
    %c0_0 = arith.constant 0 : index
    %0 = vector.load %arg3[%c0, %c0_0] : memref<1024x128xf32, #tpu.memory_space<vmem>>, vector<1024x128xf32>
    %c0_1 = arith.constant 0 : index
    %1 = memref.load %arg1[%c0_1] : memref<1xf32, #tpu.memory_space<smem>>
    %2 = vector.broadcast %1 : f32 to vector<1024x128xf32>
    %3 = arith.mulf %0, %2 : vector<1024x128xf32>
    %c0_2 = arith.constant 0 : index
    %4 = memref.load %arg2[%c0_2] : memref<1xf32, #tpu.memory_space<smem>>
    %5 = vector.broadcast %4 : f32 to vector<1024x128xf32>
    %6 = arith.addf %3, %5 : vector<1024x128xf32>
    %c0_3 = arith.constant 0 : index
    %c0_4 = arith.constant 0 : index
    %7 = vector.load %arg4[%c0_3, %c0_4] : memref<1024x128xf32, #tpu.memory_space<vmem>>, vector<1024x128xf32>
    tpu.vector_store %arg4[%c0_3, %c0_4], %6 {strides = array<i32>} : memref<1024x128xf32, #tpu.memory_space<vmem>>, vector<1024x128xf32>,
    return
  }
  func.func @transform_0(%arg0: i32, %arg1: memref<1xf32, #tpu.memory_space<smem>>, %arg2: memref<1xf32, #tpu.memory_space<smem>>) -> (i32, i32) {
    %c0_i32 = arith.constant 0 : i32
    %c0_i32_0 = arith.constant 0 : i32
    return %arg0, %c0_i32 : i32, i32
  }
  func.func @transform_1(%arg0: i32, %arg1: memref<1xf32, #tpu.memory_space<smem>>, %arg2: memref<1xf32, #tpu.memory_space<smem>>) -> (i32, i32) {
    %c0_i32 = arith.constant 0 : i32
    %c0_i32_0 = arith.constant 0 : i32
    return %arg0, %c0_i32 : i32, i32
  }
}

</mosaic_0001>

<llo_original>
// kernel: _regression_pallas.1
$region0: #{_regression_pallas.1}
  #allocation0 [shape = 'u32[]', space=smem, size = 0x4, offset = 0x4, fixed_abs, tag = 'smem constant byte address 0x4 - core index']
  #allocation1 [shape = 'u32[144,128]{1,0:T(1,128)}', space=vmem, size = 0x12000, scoped, tag = 'internal scratch']
  #allocation2 [shape = 's32[1]{0}', space=sflag, size = 0x4, scoped, tag = 'scoped memory for _regression_pallas.1']
  #allocation3 [shape = 'f32[1]{0:T(128)S(6)}', space=smem, size = 0x200, scoped, tag = 'prefetched SMEM operand 0']
  #allocation4 [shape = 'f32[1]{0:T(128)S(6)}', space=smem, size = 0x200, scoped, tag = 'prefetched SMEM operand 1']
  %s0 = inlined_call_operand.<no memory space> [shape: f32[1], index: 0, kind: input, shape index: {}]
  %s1 = inlined_call_operand.<no memory space> [shape: f32[1], index: 1, kind: input, shape index: {}]
  %s2 = inlined_call_operand.hbm [shape: f32[2048,128], index: 2, kind: input, shape index: {}]
  %s3 = inlined_call_operand.hbm [shape: f32[2048,128], index: 3, kind: output, shape index: {}]
  %s4 = sld [smem:[#allocation0]]
  $region41: #{_regression_pallas.1} parent=0
    _
  %s6 = ssub.s32 1, %s4
  %s7 = scalar_select 0, %s6, %s4
  %8 = sst [smem:[#allocation3]] %s0
  %9 = sst [smem:[#allocation4]] %s1
  $region1: #{_regression_pallas.1} parent=0
    #allocation5 [shape = 'u8[1048576]{0}', space=vmem, size = 0x100000, scoped, tag = 'input window, operand 2']
    #allocation6 [shape = 's32[2]{0}', space=sflag, size = 0x8, scoped, tag = 'scoped memory for _regression_pallas.1']
    #allocation7 [shape = 's32[2]{0}', space=sflag, size = 0x8, scoped, tag = 'scoped memory for _regression_pallas.1']
    #allocation8 [shape = 'u8[1048576]{0}', space=vmem, size = 0x100000, scoped, tag = 'output window, operand 0']
    %10 = vsyncpa [#allocation6], 0
    %s11 = scalar_lea.sflag [#allocation6], 1
    %12 = vsyncpa %s11, 0
    %13 = vsyncpa [#allocation7], 0
    %s14 = scalar_lea.sflag [#allocation7], 1
    %15 = vsyncpa %s14, 0
    loop: start=0, step=1, limit=4
    $region2: #{_regression_pallas.1} parent=1 // loop_pre_header
      _
    $region3: #{_regression_pallas.1} parent=1 // loop_header
      %s17 = sphi 0, %s21
      %p18 = scmp.ge.s32.totalorder %s17, 4
      %s27 = sphi 0, %s29
      %s30 = sphi 0, %s27
      %s31 = sphi 0, %s30
      %s47 = sphi 0, %s31
      %s53 = sphi 0, %s55
      %s56 = sphi 0, %s53
      %s57 = sphi 0, %s56
      %s73 = sphi 0, %s57
    $region4: #{_regression_pallas.1} parent=1 // loop_header_branch
      %20 = sbr.rel (%p18) target = $region8
    $region5: #{_regression_pallas.1} parent=1 // loop_body
      %s22 = ssub.s32 %s17, 1
      %s23 = ssub.s32 %s17, 2
      %s24 = sadd.s32 %s17, 1
      %s25 = ssub.s32 %s17, %s24
      %p26 = scmp.eq.s32.totalorder %s25, 0
      %s28 = sadd.s32 %s27, 1
      %s29 = scalar_select %p26, %s27, %s28
      %p32 = pneg %p26
      %p33 = scmp.eq.s32.totalorder %s17, 1
      %p34 = por %p32, %p33
      %p35 = scmp.ne.s32.totalorder %s27, %s30
      %p36 = scmp.eq.s32.totalorder %s17, 0
      %p37 = por %p35, %p36
      %p38 = scmp.ne.s32.totalorder %s27, %s30
      %p39 = scmp.eq.s32.totalorder %s22, 1
      %p40 = por %p38, %p39
      %p41 = scmp.ne.s32.totalorder %s30, %s31
      %p42 = scmp.eq.s32.totalorder %s22, 0
      %p43 = por %p41, %p42
      %p44 = scmp.ne.s32.totalorder %s30, %s31
      %p45 = scmp.eq.s32.totalorder %s23, 1
      %p46 = por %p44, %p45
      %p48 = scmp.ne.s32.totalorder %s31, %s47
      %p49 = scmp.eq.s32.totalorder %s23, 0
      %p50 = por %p48, %p49
      %s51 = ssub.s32 %s17, %s24
      %p52 = scmp.eq.s32.totalorder %s51, 0
      %s54 = sadd.s32 %s53, 1
      %s55 = scalar_select %p52, %s53, %s54
      %p58 = pneg %p52
      %p59 = scmp.eq.s32.totalorder %s17, 1
      %p60 = por %p58, %p59
      %p61 = scmp.ne.s32.totalorder %s53, %s56
      %p62 = scmp.eq.s32.totalorder %s17, 0
      %p63 = por %p61, %p62
      %p64 = scmp.ne.s32.totalorder %s53, %s56
      %p65 = scmp.eq.s32.totalorder %s22, 1
      %p66 = por %p64, %p65
      %p67 = scmp.ne.s32.totalorder %s56, %s57
      %p68 = scmp.eq.s32.totalorder %s22, 0
      %p69 = por %p67, %p68
      %p70 = scmp.ne.s32.totalorder %s56, %s57
      %p71 = scmp.eq.s32.totalorder %s23, 1
      %p72 = por %p70, %p71
      %p74 = scmp.ne.s32.totalorder %s57, %s73
      %p75 = scmp.eq.s32.totalorder %s23, 0
      %p76 = por %p74, %p75
      %p77 = scmp.le.s32.totalorder 1, %s17
      %p78 = scmp.lt.s32.totalorder %s17, 3
      %p79 = pnand %p77, %p78
      %p80 = pneg %p79
      // Predicated region
      $region9: #{_regression_pallas.1} parent=5 // pred_check
        _
      $region10: #{_regression_pallas.1} parent=5 // pred_check_branch
        %82 = sbr.rel (%p79) target = $region12
      $region11: #{_regression_pallas.1} parent=5 // pred_region
        %s83 = ssub.s32 %s17, 1
      $region12: #{_regression_pallas.1} parent=5 // pred_fallthru
        _
      %p84 = scmp.lt.s32.totalorder %s17, 2
      // Predicated region
      $region13: #{_regression_pallas.1} parent=5 // pred_check
        %p85 = pneg %p84
      $region14: #{_regression_pallas.1} parent=5 // pred_check_branch
        %87 = sbr.rel (%p85) target = $region16
      $region15: #{_regression_pallas.1} parent=5 // pred_region
        // Predicated region
        $region17: #{_regression_pallas.1} parent=15 // pred_check
          %p88 = pneg %p37
        $region18: #{_regression_pallas.1} parent=15 // pred_check_branch
          %90 = sbr.rel (%p88) target = $region20
        $region19: #{_regression_pallas.1} parent=15 // pred_region
          %s91 = sand.u32 %s27, 1
          %s92 = scalar_lea.sflag [#allocation6], %s91
          %s93 = sand.u32 %s27, 1
          %s94 = smul.addr %s93, 1024
          %s95 = scalar_lea.vmem [#allocation5], %s94
          %s96 = smul.u32 128, %s17
          %s98 = ssub.s32 16384, 16384
          %99 = vsyncadd %s92, %s98
          %s100 = smul.addr %s96, 128
          %s101 = scalar_lea.hbm %s2, %s100
          %s102 = sshll.u32 %s95, 4
          %s103 = int_to_ptr.vmem [resolvable:$true] %s102
          %108 = dma.hbm_to_vmem [thread:$0]  %s101, 16384, %s103, %s92, 128, 128, 8
        $region20: #{_regression_pallas.1} parent=15 // pred_fallthru
          _
      $region16: #{_regression_pallas.1} parent=5 // pred_fallthru
        _
      %p109 = scmp.le.s32.totalorder 1, %s17
      %p110 = scmp.lt.s32.totalorder %s17, 3
      %p111 = pnand %p109, %p110
      %p112 = pneg %p111
      // Predicated region
      $region21: #{_regression_pallas.1} parent=5 // pred_check
        _
      $region22: #{_regression_pallas.1} parent=5 // pred_check_branch
        %114 = sbr.rel (%p111) target = $region24
      $region23: #{_regression_pallas.1} parent=5 // pred_region
        %s115 = ssub.s32 %s17, 1
        %s116 = sand.u32 %s30, 1
        %s117 = scalar_lea.sflag [#allocation6], %s116
        %s118 = sand.u32 %s30, 1
        %s119 = smul.addr %s118, 1024
        %s120 = scalar_lea.vmem [#allocation5], %s119
        // Predicated region
        $region25: #{_regression_pallas.1} parent=23 // pred_check
          %p121 = pneg %p43
        $region26: #{_regression_pallas.1} parent=23 // pred_check_branch
          %123 = sbr.rel (%p121) target = $region28
        $region27: #{_regression_pallas.1} parent=23 // pred_region
          %124 = dma.done %s117, 16384
        $region28: #{_regression_pallas.1} parent=23 // pred_fallthru
          _
        %s125 = sand.u32 %s30, 1
        %s126 = scalar_lea.sflag [#allocation6], %s125
        %s127 = sand.u32 %s30, 1
        %s128 = smul.addr %s127, 1024
        %s129 = scalar_lea.vmem [#allocation5], %s128
        %p130 = pneg %p43
        %p131 = pneg %p40
        %p132 = pneg %p69
        %p133 = pneg %p66
        %s134 = sand.u32 %s56, 1
        %s135 = scalar_lea.sflag [#allocation7], %s134
        %s136 = sand.u32 %s56, 1
        %s137 = smul.addr %s136, 1024
        %s138 = scalar_lea.vmem [#allocation8], %s137
        %s139 = smul.u32 128, %s22
        %s140 = smul.u32 128, %s22
        %v141 = vld [vmem:[%s120] sm:$0xff]
        %v142 = vld [vmem:[%s120 + $0x8] sm:$0xff]
        %v143 = vld [vmem:[%s120 + $0x10] sm:$0xff]
        %v144 = vld [vmem:[%s120 + $0x18] sm:$0xff]
        %v145 = vld [vmem:[%s120 + $0x20] sm:$0xff]
        %v146 = vld [vmem:[%s120 + $0x28] sm:$0xff]
        %v147 = vld [vmem:[%s120 + $0x30] sm:$0xff]
        %v148 = vld [vmem:[%s120 + $0x38] sm:$0xff]
        %v149 = vld [vmem:[%s120 + $0x40] sm:$0xff]
        %v150 = vld [vmem:[%s120 + $0x48] sm:$0xff]
        %v151 = vld [vmem:[%s120 + $0x50] sm:$0xff]
        %v152 = vld [vmem:[%s120 + $0x58] sm:$0xff]
        %v153 = vld [vmem:[%s120 + $0x60] sm:$0xff]
        %v154 = vld [vmem:[%s120 + $0x68] sm:$0xff]
        %v155 = vld [vmem:[%s120 + $0x70] sm:$0xff]
        %v156 = vld [vmem:[%s120 + $0x78] sm:$0xff]
        %v157 = vld [vmem:[%s120 + $0x80] sm:$0xff]
        %v158 = vld [vmem:[%s120 + $0x88] sm:$0xff]
        %v159 = vld [vmem:[%s120 + $0x90] sm:$0xff]
        %v160 = vld [vmem:[%s120 + $0x98] sm:$0xff]
        %v161 = vld [vmem:[%s120 + $0xa0] sm:$0xff]
        %v162 = vld [vmem:[%s120 + $0xa8] sm:$0xff]
        %v163 = vld [vmem:[%s120 + $0xb0] sm:$0xff]
        %v164 = vld [vmem:[%s120 + $0xb8] sm:$0xff]
        %v165 = vld [vmem:[%s120 + $0xc0] sm:$0xff]
        %v166 = vld [vmem:[%s120 + $0xc8] sm:$0xff]
        %v167 = vld [vmem:[%s120 + $0xd0] sm:$0xff]
        %v168 = vld [vmem:[%s120 + $0xd8] sm:$0xff]
        %v169 = vld [vmem:[%s120 + $0xe0] sm:$0xff]
        %v170 = vld [vmem:[%s120 + $0xe8] sm:$0xff]
        %v171 = vld [vmem:[%s120 + $0xf0] sm:$0xff]
        %v172 = vld [vmem:[%s120 + $0xf8] sm:$0xff]
        %v173 = vld [vmem:[%s120 + $0x100] sm:$0xff]
        %v174 = vld [vmem:[%s120 + $0x108] sm:$0xff]
        %v175 = vld [vmem:[%s120 + $0x110] sm:$0xff]
        %v176 = vld [vmem:[%s120 + $0x118] sm:$0xff]
        %v177 = vld [vmem:[%s120 + $0x120] sm:$0xff]
        %v178 = vld [vmem:[%s120 + $0x128] sm:$0xff]
        %v179 = vld [vmem:[%s120 + $0x130] sm:$0xff]
        %v180 = vld [vmem:[%s120 + $0x138] sm:$0xff]
        %v181 = vld [vmem:[%s120 + $0x140] sm:$0xff]
        %v182 = vld [vmem:[%s120 + $0x148] sm:$0xff]
        %v183 = vld [vmem:[%s120 + $0x150] sm:$0xff]
        %v184 = vld [vmem:[%s120 + $0x158] sm:$0xff]
        %v185 = vld [vmem:[%s120 + $0x160] sm:$0xff]
        %v186 = vld [vmem:[%s120 + $0x168] sm:$0xff]
        %v187 = vld [vmem:[%s120 + $0x170] sm:$0xff]
        %v188 = vld [vmem:[%s120 + $0x178] sm:$0xff]
        %v189 = vld [vmem:[%s120 + $0x180] sm:$0xff]
        %v190 = vld [vmem:[%s120 + $0x188] sm:$0xff]
        %v191 = vld [vmem:[%s120 + $0x190] sm:$0xff]
        %v192 = vld [vmem:[%s120 + $0x198] sm:$0xff]
        %v193 = vld [vmem:[%s120 + $0x1a0] sm:$0xff]
        %v194 = vld [vmem:[%s120 + $0x1a8] sm:$0xff]
        %v195 = vld [vmem:[%s120 + $0x1b0] sm:$0xff]
        %v196 = vld [vmem:[%s120 + $0x1b8] sm:$0xff]
        %v197 = vld [vmem:[%s120 + $0x1c0] sm:$0xff]
        %v198 = vld [vmem:[%s120 + $0x1c8] sm:$0xff]
        %v199 = vld [vmem:[%s120 + $0x1d0] sm:$0xff]
        %v200 = vld [vmem:[%s120 + $0x1d8] sm:$0xff]
        %v201 = vld [vmem:[%s120 + $0x1e0] sm:$0xff]
        %v202 = vld [vmem:[%s120 + $0x1e8] sm:$0xff]
        %v203 = vld [vmem:[%s120 + $0x1f0] sm:$0xff]
        %v204 = vld [vmem:[%s120 + $0x1f8] sm:$0xff]
        %v205 = vld [vmem:[%s120 + $0x200] sm:$0xff]
        %v206 = vld [vmem:[%s120 + $0x208] sm:$0xff]
        %v207 = vld [vmem:[%s120 + $0x210] sm:$0xff]
        %v208 = vld [vmem:[%s120 + $0x218] sm:$0xff]
        %v209 = vld [vmem:[%s120 + $0x220] sm:$0xff]
        %v210 = vld [vmem:[%s120 + $0x228] sm:$0xff]
        %v211 = vld [vmem:[%s120 + $0x230] sm:$0xff]
        %v212 = vld [vmem:[%s120 + $0x238] sm:$0xff]
        %v213 = vld [vmem:[%s120 + $0x240] sm:$0xff]
        %v214 = vld [vmem:[%s120 + $0x248] sm:$0xff]
        %v215 = vld [vmem:[%s120 + $0x250] sm:$0xff]
        %v216 = vld [vmem:[%s120 + $0x258] sm:$0xff]
        %v217 = vld [vmem:[%s120 + $0x260] sm:$0xff]
        %v218 = vld [vmem:[%s120 + $0x268] sm:$0xff]
        %v219 = vld [vmem:[%s120 + $0x270] sm:$0xff]
        %v220 = vld [vmem:[%s120 + $0x278] sm:$0xff]
        %v221 = vld [vmem:[%s120 + $0x280] sm:$0xff]
        %v222 = vld [vmem:[%s120 + $0x288] sm:$0xff]
        %v223 = vld [vmem:[%s120 + $0x290] sm:$0xff]
        %v224 = vld [vmem:[%s120 + $0x298] sm:$0xff]
        %v225 = vld [vmem:[%s120 + $0x2a0] sm:$0xff]
        %v226 = vld [vmem:[%s120 + $0x2a8] sm:$0xff]
        %v227 = vld [vmem:[%s120 + $0x2b0] sm:$0xff]
        %v228 = vld [vmem:[%s120 + $0x2b8] sm:$0xff]
        %v229 = vld [vmem:[%s120 + $0x2c0] sm:$0xff]
        %v230 = vld [vmem:[%s120 + $0x2c8] sm:$0xff]
        %v231 = vld [vmem:[%s120 + $0x2d0] sm:$0xff]
        %v232 = vld [vmem:[%s120 + $0x2d8] sm:$0xff]
        %v233 = vld [vmem:[%s120 + $0x2e0] sm:$0xff]
        %v234 = vld [vmem:[%s120 + $0x2e8] sm:$0xff]
        %v235 = vld [vmem:[%s120 + $0x2f0] sm:$0xff]
        %v236 = vld [vmem:[%s120 + $0x2f8] sm:$0xff]
        %v237 = vld [vmem:[%s120 + $0x300] sm:$0xff]
        %v238 = vld [vmem:[%s120 + $0x308] sm:$0xff]
        %v239 = vld [vmem:[%s120 + $0x310] sm:$0xff]
        %v240 = vld [vmem:[%s120 + $0x318] sm:$0xff]
        %v241 = vld [vmem:[%s120 + $0x320] sm:$0xff]
        %v242 = vld [vmem:[%s120 + $0x328] sm:$0xff]
        %v243 = vld [vmem:[%s120 + $0x330] sm:$0xff]
        %v244 = vld [vmem:[%s120 + $0x338] sm:$0xff]
        %v245 = vld [vmem:[%s120 + $0x340] sm:$0xff]
        %v246 = vld [vmem:[%s120 + $0x348] sm:$0xff]
        %v247 = vld [vmem:[%s120 + $0x350] sm:$0xff]
        %v248 = vld [vmem:[%s120 + $0x358] sm:$0xff]
        %v249 = vld [vmem:[%s120 + $0x360] sm:$0xff]
        %v250 = vld [vmem:[%s120 + $0x368] sm:$0xff]
        %v251 = vld [vmem:[%s120 + $0x370] sm:$0xff]
        %v252 = vld [vmem:[%s120 + $0x378] sm:$0xff]
        %v253 = vld [vmem:[%s120 + $0x380] sm:$0xff]
        %v254 = vld [vmem:[%s120 + $0x388] sm:$0xff]
        %v255 = vld [vmem:[%s120 + $0x390] sm:$0xff]
        %v256 = vld [vmem:[%s120 + $0x398] sm:$0xff]
        %v257 = vld [vmem:[%s120 + $0x3a0] sm:$0xff]
        %v258 = vld [vmem:[%s120 + $0x3a8] sm:$0xff]
        %v259 = vld [vmem:[%s120 + $0x3b0] sm:$0xff]
        %v260 = vld [vmem:[%s120 + $0x3b8] sm:$0xff]
        %v261 = vld [vmem:[%s120 + $0x3c0] sm:$0xff]
        %v262 = vld [vmem:[%s120 + $0x3c8] sm:$0xff]
        %v263 = vld [vmem:[%s120 + $0x3d0] sm:$0xff]
        %v264 = vld [vmem:[%s120 + $0x3d8] sm:$0xff]
        %v265 = vld [vmem:[%s120 + $0x3e0] sm:$0xff]
        %v266 = vld [vmem:[%s120 + $0x3e8] sm:$0xff]
        %v267 = vld [vmem:[%s120 + $0x3f0] sm:$0xff]
        %v268 = vld [vmem:[%s120 + $0x3f8] sm:$0xff]
        %s269 = sld [smem:[#allocation3]]
        %v270 = vstv %s269
        %v271 = vmul.f32 %v141, %v270
        %v272 = vmul.f32 %v142, %v270
        %v273 = vmul.f32 %v143, %v270
        %v274 = vmul.f32 %v144, %v270
        %v275 = vmul.f32 %v145, %v270
        %v276 = vmul.f32 %v146, %v270
        %v277 = vmul.f32 %v147, %v270
        %v278 = vmul.f32 %v148, %v270
        %v279 = vmul.f32 %v149, %v270
        %v280 = vmul.f32 %v150, %v270
        %v281 = vmul.f32 %v151, %v270
        %v282 = vmul.f32 %v152, %v270
        %v283 = vmul.f32 %v153, %v270
        %v284 = vmul.f32 %v154, %v270
        %v285 = vmul.f32 %v155, %v270
        %v286 = vmul.f32 %v156, %v270
        %v287 = vmul.f32 %v157, %v270
        %v288 = vmul.f32 %v158, %v270
        %v289 = vmul.f32 %v159, %v270
        %v290 = vmul.f32 %v160, %v270
        %v291 = vmul.f32 %v161, %v270
        %v292 = vmul.f32 %v162, %v270
        %v293 = vmul.f32 %v163, %v270
        %v294 = vmul.f32 %v164, %v270
        %v295 = vmul.f32 %v165, %v270
        %v296 = vmul.f32 %v166, %v270
        %v297 = vmul.f32 %v167, %v270
        %v298 = vmul.f32 %v168, %v270
        %v299 = vmul.f32 %v169, %v270
        %v300 = vmul.f32 %v170, %v270
        %v301 = vmul.f32 %v171, %v270
        %v302 = vmul.f32 %v172, %v270
        %v303 = vmul.f32 %v173, %v270
        %v304 = vmul.f32 %v174, %v270
        %v305 = vmul.f32 %v175, %v270
        %v306 = vmul.f32 %v176, %v270
        %v307 = vmul.f32 %v177, %v270
        %v308 = vmul.f32 %v178, %v270
        %v309 = vmul.f32 %v179, %v270
        %v310 = vmul.f32 %v180, %v270
        %v311 = vmul.f32 %v181, %v270
        %v312 = vmul.f32 %v182, %v270
        %v313 = vmul.f32 %v183, %v270
        %v314 = vmul.f32 %v184, %v270
        %v315 = vmul.f32 %v185, %v270
        %v316 = vmul.f32 %v186, %v270
        %v317 = vmul.f32 %v187, %v270
        %v318 = vmul.f32 %v188, %v270
        %v319 = vmul.f32 %v189, %v270
        %v320 = vmul.f32 %v190, %v270
        %v321 = vmul.f32 %v191, %v270
        %v322 = vmul.f32 %v192, %v270
        %v323 = vmul.f32 %v193, %v270
        %v324 = vmul.f32 %v194, %v270
        %v325 = vmul.f32 %v195, %v270
        %v326 = vmul.f32 %v196, %v270
        %v327 = vmul.f32 %v197, %v270
        %v328 = vmul.f32 %v198, %v270
        %v329 = vmul.f32 %v199, %v270
        %v330 = vmul.f32 %v200, %v270
        %v331 = vmul.f32 %v201, %v270
        %v332 = vmul.f32 %v202, %v270
        %v333 = vmul.f32 %v203, %v270
        %v334 = vmul.f32 %v204, %v270
        %v335 = vmul.f32 %v205, %v270
        %v336 = vmul.f32 %v206, %v270
        %v337 = vmul.f32 %v207, %v270
        %v338 = vmul.f32 %v208, %v270
        %v339 = vmul.f32 %v209, %v270
        %v340 = vmul.f32 %v210, %v270
        %v341 = vmul.f32 %v211, %v270
        %v342 = vmul.f32 %v212, %v270
        %v343 = vmul.f32 %v213, %v270
        %v344 = vmul.f32 %v214, %v270
        %v345 = vmul.f32 %v215, %v270
        %v346 = vmul.f32 %v216, %v270
        %v347 = vmul.f32 %v217, %v270
        %v348 = vmul.f32 %v218, %v270
        %v349 = vmul.f32 %v219, %v270
        %v350 = vmul.f32 %v220, %v270
        %v351 = vmul.f32 %v221, %v270
        %v352 = vmul.f32 %v222, %v270
        %v353 = vmul.f32 %v223, %v270
        %v354 = vmul.f32 %v224, %v270
        %v355 = vmul.f32 %v225, %v270
        %v356 = vmul.f32 %v226, %v270
        %v357 = vmul.f32 %v227, %v270
        %v358 = vmul.f32 %v228, %v270
        %v359 = vmul.f32 %v229, %v270
        %v360 = vmul.f32 %v230, %v270
        %v361 = vmul.f32 %v231, %v270
        %v362 = vmul.f32 %v232, %v270
        %v363 = vmul.f32 %v233, %v270
        %v364 = vmul.f32 %v234, %v270
        %v365 = vmul.f32 %v235, %v270
        %v366 = vmul.f32 %v236, %v270
        %v367 = vmul.f32 %v237, %v270
        %v368 = vmul.f32 %v238, %v270
        %v369 = vmul.f32 %v239, %v270
        %v370 = vmul.f32 %v240, %v270
        %v371 = vmul.f32 %v241, %v270
        %v372 = vmul.f32 %v242, %v270
        %v373 = vmul.f32 %v243, %v270
        %v374 = vmul.f32 %v244, %v270
        %v375 = vmul.f32 %v245, %v270
        %v376 = vmul.f32 %v246, %v270
        %v377 = vmul.f32 %v247, %v270
        %v378 = vmul.f32 %v248, %v270
        %v379 = vmul.f32 %v249, %v270
        %v380 = vmul.f32 %v250, %v270
        %v381 = vmul.f32 %v251, %v270
        %v382 = vmul.f32 %v252, %v270
        %v383 = vmul.f32 %v253, %v270
        %v384 = vmul.f32 %v254, %v270
        %v385 = vmul.f32 %v255, %v270
        %v386 = vmul.f32 %v256, %v270
        %v387 = vmul.f32 %v257, %v270
        %v388 = vmul.f32 %v258, %v270
        %v389 = vmul.f32 %v259, %v270
        %v390 = vmul.f32 %v260, %v270
        %v391 = vmul.f32 %v261, %v270
        %v392 = vmul.f32 %v262, %v270
        %v393 = vmul.f32 %v263, %v270
        %v394 = vmul.f32 %v264, %v270
        %v395 = vmul.f32 %v265, %v270
        %v396 = vmul.f32 %v266, %v270
        %v397 = vmul.f32 %v267, %v270
        %v398 = vmul.f32 %v268, %v270
        %s399 = sld [smem:[#allocation4]]
        %v400 = vstv %s399
        %v401 = vadd.f32 %v271, %v400
        %v402 = vadd.f32 %v272, %v400
        %v403 = vadd.f32 %v273, %v400
        %v404 = vadd.f32 %v274, %v400
        %v405 = vadd.f32 %v275, %v400
        %v406 = vadd.f32 %v276, %v400
        %v407 = vadd.f32 %v277, %v400
        %v408 = vadd.f32 %v278, %v400
        %v409 = vadd.f32 %v279, %v400
        %v410 = vadd.f32 %v280, %v400
        %v411 = vadd.f32 %v281, %v400
        %v412 = vadd.f32 %v282, %v400
        %v413 = vadd.f32 %v283, %v400
        %v414 = vadd.f32 %v284, %v400
        %v415 = vadd.f32 %v285, %v400
        %v416 = vadd.f32 %v286, %v400
        %v417 = vadd.f32 %v287, %v400
        %v418 = vadd.f32 %v288, %v400
        %v419 = vadd.f32 %v289, %v400
        %v420 = vadd.f32 %v290, %v400
        %v421 = vadd.f32 %v291, %v400
        %v422 = vadd.f32 %v292, %v400
        %v423 = vadd.f32 %v293, %v400
        %v424 = vadd.f32 %v294, %v400
        %v425 = vadd.f32 %v295, %v400
        %v426 = vadd.f32 %v296, %v400
        %v427 = vadd.f32 %v297, %v400
        %v428 = vadd.f32 %v298, %v400
        %v429 = vadd.f32 %v299, %v400
        %v430 = vadd.f32 %v300, %v400
        %v431 = vadd.f32 %v301, %v400
        %v432 = vadd.f32 %v302, %v400
        %v433 = vadd.f32 %v303, %v400
        %v434 = vadd.f32 %v304, %v400
        %v435 = vadd.f32 %v305, %v400
        %v436 = vadd.f32 %v306, %v400
        %v437 = vadd.f32 %v307, %v400
        %v438 = vadd.f32 %v308, %v400
        %v439 = vadd.f32 %v309, %v400
        %v440 = vadd.f32 %v310, %v400
        %v441 = vadd.f32 %v311, %v400
        %v442 = vadd.f32 %v312, %v400
        %v443 = vadd.f32 %v313, %v400
        %v444 = vadd.f32 %v314, %v400
        %v445 = vadd.f32 %v315, %v400
        %v446 = vadd.f32 %v316, %v400
        %v447 = vadd.f32 %v317, %v400
        %v448 = vadd.f32 %v318, %v400
        %v449 = vadd.f32 %v319, %v400
        %v450 = vadd.f32 %v320, %v400
        %v451 = vadd.f32 %v321, %v400
        %v452 = vadd.f32 %v322, %v400
        %v453 = vadd.f32 %v323, %v400
        %v454 = vadd.f32 %v324, %v400
        %v455 = vadd.f32 %v325, %v400
        %v456 = vadd.f32 %v326, %v400
        %v457 = vadd.f32 %v327, %v400
        %v458 = vadd.f32 %v328, %v400
        %v459 = vadd.f32 %v329, %v400
        %v460 = vadd.f32 %v330, %v400
        %v461 = vadd.f32 %v331, %v400
        %v462 = vadd.f32 %v332, %v400
        %v463 = vadd.f32 %v333, %v400
        %v464 = vadd.f32 %v334, %v400
        %v465 = vadd.f32 %v335, %v400
        %v466 = vadd.f32 %v336, %v400
        %v467 = vadd.f32 %v337, %v400
        %v468 = vadd.f32 %v338, %v400
        %v469 = vadd.f32 %v339, %v400
        %v470 = vadd.f32 %v340, %v400
        %v471 = vadd.f32 %v341, %v400
        %v472 = vadd.f32 %v342, %v400
        %v473 = vadd.f32 %v343, %v400
        %v474 = vadd.f32 %v344, %v400
        %v475 = vadd.f32 %v345, %v400
        %v476 = vadd.f32 %v346, %v400
        %v477 = vadd.f32 %v347, %v400
        %v478 = vadd.f32 %v348, %v400
        %v479 = vadd.f32 %v349, %v400
        %v480 = vadd.f32 %v350, %v400
        %v481 = vadd.f32 %v351, %v400
        %v482 = vadd.f32 %v352, %v400
        %v483 = vadd.f32 %v353, %v400
        %v484 = vadd.f32 %v354, %v400
        %v485 = vadd.f32 %v355, %v400
        %v486 = vadd.f32 %v356, %v400
        %v487 = vadd.f32 %v357, %v400
        %v488 = vadd.f32 %v358, %v400
        %v489 = vadd.f32 %v359, %v400
        %v490 = vadd.f32 %v360, %v400
        %v491 = vadd.f32 %v361, %v400
        %v492 = vadd.f32 %v362, %v400
        %v493 = vadd.f32 %v363, %v400
        %v494 = vadd.f32 %v364, %v400
        %v495 = vadd.f32 %v365, %v400
        %v496 = vadd.f32 %v366, %v400
        %v497 = vadd.f32 %v367, %v400
        %v498 = vadd.f32 %v368, %v400
        %v499 = vadd.f32 %v369, %v400
        %v500 = vadd.f32 %v370, %v400
        %v501 = vadd.f32 %v371, %v400
        %v502 = vadd.f32 %v372, %v400
        %v503 = vadd.f32 %v373, %v400
        %v504 = vadd.f32 %v374, %v400
        %v505 = vadd.f32 %v375, %v400
        %v506 = vadd.f32 %v376, %v400
        %v507 = vadd.f32 %v377, %v400
        %v508 = vadd.f32 %v378, %v400
        %v509 = vadd.f32 %v379, %v400
        %v510 = vadd.f32 %v380, %v400
        %v511 = vadd.f32 %v381, %v400
        %v512 = vadd.f32 %v382, %v400
        %v513 = vadd.f32 %v383, %v400
        %v514 = vadd.f32 %v384, %v400
        %v515 = vadd.f32 %v385, %v400
        %v516 = vadd.f32 %v386, %v400
        %v517 = vadd.f32 %v387, %v400
        %v518 = vadd.f32 %v388, %v400
        %v519 = vadd.f32 %v389, %v400
        %v520 = vadd.f32 %v390, %v400
        %v521 = vadd.f32 %v391, %v400
        %v522 = vadd.f32 %v392, %v400
        %v523 = vadd.f32 %v393, %v400
        %v524 = vadd.f32 %v394, %v400
        %v525 = vadd.f32 %v395, %v400
        %v526 = vadd.f32 %v396, %v400
        %v527 = vadd.f32 %v397, %v400
        %v528 = vadd.f32 %v398, %v400
        %529 = vst [vmem:[%s138] sm:$0xff] %v401
        %530 = vst [vmem:[%s138 + $0x8] sm:$0xff] %v402
        %531 = vst [vmem:[%s138 + $0x10] sm:$0xff] %v403
        %532 = vst [vmem:[%s138 + $0x18] sm:$0xff] %v404
        %533 = vst [vmem:[%s138 + $0x20] sm:$0xff] %v405
        %534 = vst [vmem:[%s138 + $0x28] sm:$0xff] %v406
        %535 = vst [vmem:[%s138 + $0x30] sm:$0xff] %v407
        %536 = vst [vmem:[%s138 + $0x38] sm:$0xff] %v408
        %537 = vst [vmem:[%s138 + $0x40] sm:$0xff] %v409
        %538 = vst [vmem:[%s138 + $0x48] sm:$0xff] %v410
        %539 = vst [vmem:[%s138 + $0x50] sm:$0xff] %v411
        %540 = vst [vmem:[%s138 + $0x58] sm:$0xff] %v412
        %541 = vst [vmem:[%s138 + $0x60] sm:$0xff] %v413
        %542 = vst [vmem:[%s138 + $0x68] sm:$0xff] %v414
        %543 = vst [vmem:[%s138 + $0x70] sm:$0xff] %v415
        %544 = vst [vmem:[%s138 + $0x78] sm:$0xff] %v416
        %545 = vst [vmem:[%s138 + $0x80] sm:$0xff] %v417
        %546 = vst [vmem:[%s138 + $0x88] sm:$0xff] %v418
        %547 = vst [vmem:[%s138 + $0x90] sm:$0xff] %v419
        %548 = vst [vmem:[%s138 + $0x98] sm:$0xff] %v420
        %549 = vst [vmem:[%s138 + $0xa0] sm:$0xff] %v421
        %550 = vst [vmem:[%s138 + $0xa8] sm:$0xff] %v422
        %551 = vst [vmem:[%s138 + $0xb0] sm:$0xff] %v423
        %552 = vst [vmem:[%s138 + $0xb8] sm:$0xff] %v424
        %553 = vst [vmem:[%s138 + $0xc0] sm:$0xff] %v425
        %554 = vst [vmem:[%s138 + $0xc8] sm:$0xff] %v426
        %555 = vst [vmem:[%s138 + $0xd0] sm:$0xff] %v427
        %556 = vst [vmem:[%s138 + $0xd8] sm:$0xff] %v428
        %557 = vst [vmem:[%s138 + $0xe0] sm:$0xff] %v429
        %558 = vst [vmem:[%s138 + $0xe8] sm:$0xff] %v430
        %559 = vst [vmem:[%s138 + $0xf0] sm:$0xff] %v431
        %560 = vst [vmem:[%s138 + $0xf8] sm:$0xff] %v432
        %561 = vst [vmem:[%s138 + $0x100] sm:$0xff] %v433
        %562 = vst [vmem:[%s138 + $0x108] sm:$0xff] %v434
        %563 = vst [vmem:[%s138 + $0x110] sm:$0xff] %v435
        %564 = vst [vmem:[%s138 + $0x118] sm:$0xff] %v436
        %565 = vst [vmem:[%s138 + $0x120] sm:$0xff] %v437
        %566 = vst [vmem:[%s138 + $0x128] sm:$0xff] %v438
        %567 = vst [vmem:[%s138 + $0x130] sm:$0xff] %v439
        %568 = vst [vmem:[%s138 + $0x138] sm:$0xff] %v440
        %569 = vst [vmem:[%s138 + $0x140] sm:$0xff] %v441
        %570 = vst [vmem:[%s138 + $0x148] sm:$0xff] %v442
        %571 = vst [vmem:[%s138 + $0x150] sm:$0xff] %v443
        %572 = vst [vmem:[%s138 + $0x158] sm:$0xff] %v444
        %573 = vst [vmem:[%s138 + $0x160] sm:$0xff] %v445
        %574 = vst [vmem:[%s138 + $0x168] sm:$0xff] %v446
        %575 = vst [vmem:[%s138 + $0x170] sm:$0xff] %v447
        %576 = vst [vmem:[%s138 + $0x178] sm:$0xff] %v448
        %577 = vst [vmem:[%s138 + $0x180] sm:$0xff] %v449
        %578 = vst [vmem:[%s138 + $0x188] sm:$0xff] %v450
        %579 = vst [vmem:[%s138 + $0x190] sm:$0xff] %v451
        %580 = vst [vmem:[%s138 + $0x198] sm:$0xff] %v452
        %581 = vst [vmem:[%s138 + $0x1a0] sm:$0xff] %v453
        %582 = vst [vmem:[%s138 + $0x1a8] sm:$0xff] %v454
        %583 = vst [vmem:[%s138 + $0x1b0] sm:$0xff] %v455
        %584 = vst [vmem:[%s138 + $0x1b8] sm:$0xff] %v456
        %585 = vst [vmem:[%s138 + $0x1c0] sm:$0xff] %v457
        %586 = vst [vmem:[%s138 + $0x1c8] sm:$0xff] %v458
        %587 = vst [vmem:[%s138 + $0x1d0] sm:$0xff] %v459
        %588 = vst [vmem:[%s138 + $0x1d8] sm:$0xff] %v460
        %589 = vst [vmem:[%s138 + $0x1e0] sm:$0xff] %v461
        %590 = vst [vmem:[%s138 + $0x1e8] sm:$0xff] %v462
        %591 = vst [vmem:[%s138 + $0x1f0] sm:$0xff] %v463
        %592 = vst [vmem:[%s138 + $0x1f8] sm:$0xff] %v464
        %593 = vst [vmem:[%s138 + $0x200] sm:$0xff] %v465
        %594 = vst [vmem:[%s138 + $0x208] sm:$0xff] %v466
        %595 = vst [vmem:[%s138 + $0x210] sm:$0xff] %v467
        %596 = vst [vmem:[%s138 + $0x218] sm:$0xff] %v468
        %597 = vst [vmem:[%s138 + $0x220] sm:$0xff] %v469
        %598 = vst [vmem:[%s138 + $0x228] sm:$0xff] %v470
        %599 = vst [vmem:[%s138 + $0x230] sm:$0xff] %v471
        %600 = vst [vmem:[%s138 + $0x238] sm:$0xff] %v472
        %601 = vst [vmem:[%s138 + $0x240] sm:$0xff] %v473
        %602 = vst [vmem:[%s138 + $0x248] sm:$0xff] %v474
        %603 = vst [vmem:[%s138 + $0x250] sm:$0xff] %v475
        %604 = vst [vmem:[%s138 + $0x258] sm:$0xff] %v476
        %605 = vst [vmem:[%s138 + $0x260] sm:$0xff] %v477
        %606 = vst [vmem:[%s138 + $0x268] sm:$0xff] %v478
        %607 = vst [vmem:[%s138 + $0x270] sm:$0xff] %v479
        %608 = vst [vmem:[%s138 + $0x278] sm:$0xff] %v480
        %609 = vst [vmem:[%s138 + $0x280] sm:$0xff] %v481
        %610 = vst [vmem:[%s138 + $0x288] sm:$0xff] %v482
        %611 = vst [vmem:[%s138 + $0x290] sm:$0xff] %v483
        %612 = vst [vmem:[%s138 + $0x298] sm:$0xff] %v484
        %613 = vst [vmem:[%s138 + $0x2a0] sm:$0xff] %v485
        %614 = vst [vmem:[%s138 + $0x2a8] sm:$0xff] %v486
        %615 = vst [vmem:[%s138 + $0x2b0] sm:$0xff] %v487
        %616 = vst [vmem:[%s138 + $0x2b8] sm:$0xff] %v488
        %617 = vst [vmem:[%s138 + $0x2c0] sm:$0xff] %v489
        %618 = vst [vmem:[%s138 + $0x2c8] sm:$0xff] %v490
        %619 = vst [vmem:[%s138 + $0x2d0] sm:$0xff] %v491
        %620 = vst [vmem:[%s138 + $0x2d8] sm:$0xff] %v492
        %621 = vst [vmem:[%s138 + $0x2e0] sm:$0xff] %v493
        %622 = vst [vmem:[%s138 + $0x2e8] sm:$0xff] %v494
        %623 = vst [vmem:[%s138 + $0x2f0] sm:$0xff] %v495
        %624 = vst [vmem:[%s138 + $0x2f8] sm:$0xff] %v496
        %625 = vst [vmem:[%s138 + $0x300] sm:$0xff] %v497
        %626 = vst [vmem:[%s138 + $0x308] sm:$0xff] %v498
        %627 = vst [vmem:[%s138 + $0x310] sm:$0xff] %v499
        %628 = vst [vmem:[%s138 + $0x318] sm:$0xff] %v500
        %629 = vst [vmem:[%s138 + $0x320] sm:$0xff] %v501
        %630 = vst [vmem:[%s138 + $0x328] sm:$0xff] %v502
        %631 = vst [vmem:[%s138 + $0x330] sm:$0xff] %v503
        %632 = vst [vmem:[%s138 + $0x338] sm:$0xff] %v504
        %633 = vst [vmem:[%s138 + $0x340] sm:$0xff] %v505
        %634 = vst [vmem:[%s138 + $0x348] sm:$0xff] %v506
        %635 = vst [vmem:[%s138 + $0x350] sm:$0xff] %v507
        %636 = vst [vmem:[%s138 + $0x358] sm:$0xff] %v508
        %637 = vst [vmem:[%s138 + $0x360] sm:$0xff] %v509
        %638 = vst [vmem:[%s138 + $0x368] sm:$0xff] %v510
        %639 = vst [vmem:[%s138 + $0x370] sm:$0xff] %v511
        %640 = vst [vmem:[%s138 + $0x378] sm:$0xff] %v512
        %641 = vst [vmem:[%s138 + $0x380] sm:$0xff] %v513
        %642 = vst [vmem:[%s138 + $0x388] sm:$0xff] %v514
        %643 = vst [vmem:[%s138 + $0x390] sm:$0xff] %v515
        %644 = vst [vmem:[%s138 + $0x398] sm:$0xff] %v516
        %645 = vst [vmem:[%s138 + $0x3a0] sm:$0xff] %v517
        %646 = vst [vmem:[%s138 + $0x3a8] sm:$0xff] %v518
        %647 = vst [vmem:[%s138 + $0x3b0] sm:$0xff] %v519
        %648 = vst [vmem:[%s138 + $0x3b8] sm:$0xff] %v520
        %649 = vst [vmem:[%s138 + $0x3c0] sm:$0xff] %v521
        %650 = vst [vmem:[%s138 + $0x3c8] sm:$0xff] %v522
        %651 = vst [vmem:[%s138 + $0x3d0] sm:$0xff] %v523
        %652 = vst [vmem:[%s138 + $0x3d8] sm:$0xff] %v524
        %653 = vst [vmem:[%s138 + $0x3e0] sm:$0xff] %v525
        %654 = vst [vmem:[%s138 + $0x3e8] sm:$0xff] %v526
        %655 = vst [vmem:[%s138 + $0x3f0] sm:$0xff] %v527
        %656 = vst [vmem:[%s138 + $0x3f8] sm:$0xff] %v528
        %s657 = sand.u32 %s56, 1
        %s658 = scalar_lea.sflag [#allocation7], %s657
        %s659 = sand.u32 %s56, 1
        %s660 = smul.addr %s659, 1024
        %s661 = scalar_lea.vmem [#allocation8], %s660
        // Predicated region
        $region29: #{_regression_pallas.1} parent=23 // pred_check
          %p662 = pneg %p66
        $region30: #{_regression_pallas.1} parent=23 // pred_check_branch
          %664 = sbr.rel (%p662) target = $region32
        $region31: #{_regression_pallas.1} parent=23 // pred_region
          %s665 = smul.u32 128, %s22
          %s667 = ssub.s32 16384, 16384
          %668 = vsyncadd %s658, %s667
          %s669 = smul.addr %s665, 128
          %s670 = scalar_lea.hbm %s3, %s669
          %s671 = sshll.u32 %s661, 4
          %s672 = int_to_ptr.vmem [resolvable:$true] %s671
          %677 = dma.vmem_to_hbm [thread:$0]  %s672, 16384, %s670, %s658, 128, 128, 8
        $region32: #{_regression_pallas.1} parent=23 // pred_fallthru
          _
      $region24: #{_regression_pallas.1} parent=5 // pred_fallthru
        _
      %p678 = scmp.le.s32.totalorder 2, %s17
      // Predicated region
      $region33: #{_regression_pallas.1} parent=5 // pred_check
        %p679 = pneg %p678
      $region34: #{_regression_pallas.1} parent=5 // pred_check_branch
        %681 = sbr.rel (%p679) target = $region36
      $region35: #{_regression_pallas.1} parent=5 // pred_region
        %s682 = ssub.s32 %s17, 2
        // Predicated region
        $region37: #{_regression_pallas.1} parent=35 // pred_check
          %p683 = pneg %p72
        $region38: #{_regression_pallas.1} parent=35 // pred_check_branch
          %685 = sbr.rel (%p683) target = $region40
        $region39: #{_regression_pallas.1} parent=35 // pred_region
          %s686 = sand.u32 %s57, 1
          %s687 = scalar_lea.sflag [#allocation7], %s686
          %s688 = sand.u32 %s57, 1
          %s689 = smul.addr %s688, 1024
          %s690 = scalar_lea.vmem [#allocation8], %s689
          %691 = dma.done %s687, 16384
        $region40: #{_regression_pallas.1} parent=35 // pred_fallthru
          _
      $region36: #{_regression_pallas.1} parent=5 // pred_fallthru
        _
    $region6: #{_regression_pallas.1} parent=1 // loop_footer
      %s21 = sadd.s32 1, %s17
    $region7: #{_regression_pallas.1} parent=1 // loop_footer_branch
      %16 = sbr.rel target = $region3
    $region8: #{_regression_pallas.1} parent=1 // loop_exit
      _
    %692 = vsyncpa [#allocation6], 1
    %s693 = scalar_lea.sflag [#allocation6], 1
    %694 = vsyncpa %s693, 1
    %695 = vsyncpa [#allocation7], 1
    %s696 = scalar_lea.sflag [#allocation7], 1
    %697 = vsyncpa %s696, 1

</llo_original>
